<compile_context>
chip_gen: v7x
topology: tpu7x:2x2x1
jax: 0.10.0
libtpu: 0.0.40
codegen_flags: <defaults>
</compile_context>

<pallas_src>
import math

import jax
import jax.numpy as jnp
from jax.experimental import pallas as pl
from jax.experimental.pallas import tpu as pltpu


def _lcm_time_embedding_kernel(t_ref, tab_ref, w1_ref, b1_ref, w2_ref, b2_ref, o_ref):
    """Fused sinusoidal embedding + MLP (Linear -> SiLU -> Linear).

    t_ref   : [bb, 1]    f32        block of time steps
    tab_ref : [2, C]     f32        row 0 = [freq|freq], row 1 = [0|pi/2]
    w1_ref  : [C, 4C]    f32/bf16   rows pre-permuted for [sin|cos] layout
    b1_ref  : [1, 4C]    f32
    w2_ref  : [4C, Cp]   f32/bf16   Cp = C padded to a multiple of 128
    b2_ref  : [1, Cp]    f32
    o_ref   : [bb, Cp]   f32
    """
    t = t_ref[...]                                       # [bb, 1]
    # One full-width sin gives [sin(t*f) | cos(t*f)] (cos(x) == sin(x + pi/2)).
    angle = t * tab_ref[0:1, :] + tab_ref[1:2, :]        # [bb, C]
    emb = jnp.sin(angle)                                 # [bb, C], f32

    # Linear(C, 4C) -> SiLU -> Linear(4C, Cp); matmuls in the weight dtype
    # (bf16 fast path), accumulate + pointwise math in f32.
    h = jnp.dot(emb.astype(w1_ref.dtype), w1_ref[...],
                preferred_element_type=jnp.float32) + b1_ref[...]
    h = h * jax.nn.sigmoid(h)                            # SiLU (f32, EUP)
    out = jnp.dot(h.astype(w2_ref.dtype), w2_ref[...],
                  preferred_element_type=jnp.float32) + b2_ref[...]

    o_ref[...] = out.astype(o_ref.dtype)


def lcm_time_embedding(t, w1, b1, w2, b2, *, block_b=4096, use_bf16=True,
                       return_padded=False):
    """t: [B] time steps -> [B, C] embedding (matches the PyTorch module).

    Weights are [in_features, out_features]; the kernel computes x @ W + b
    (== PyTorch x @ W.T + b with W stored [out, in]).
    """
    B = t.shape[0]
    C, H = w1.shape                      # H == 4*C
    half = C // 2
    LANE = 128

    # ---------- trace-time preprocessing (free at runtime) ----------
    # Frequency table 1 / 10000 ** (k / (C//2 - 1)); guarded for C == 2
    # (PyTorch would divide by zero there).
    denom = float(max(half - 1, 1))
    freq = 1.0 / 10000.0 ** (jnp.arange(half, dtype=jnp.float32) / denom)
    freq_full = jnp.concatenate([freq, freq])                       # [C]
    phase = jnp.concatenate([jnp.zeros((half,), jnp.float32),
                             jnp.full((half,), jnp.pi / 2.0, jnp.float32)])
    table = jnp.stack([freq_full, phase])                           # [2, C]

    # Row-permute w1 so the de-interleaved [sin | cos] embedding reproduces
    # the interleaved PyTorch layout after the first matmul.
    perm = jnp.concatenate([jnp.arange(half, dtype=jnp.int32) * 2,
                            jnp.arange(half, dtype=jnp.int32) * 2 + 1])
    w1p = w1[perm, :]

    # Lane-dense output: pad second-matmul N up to a multiple of 128 so the
    # kernel's output stores are unmasked vst.
    C_pad = ((C + LANE - 1) // LANE) * LANE
    if C_pad != C:
        w2p = jnp.pad(w2, ((0, 0), (0, C_pad - C)))
        b2p = jnp.pad(b2, ((0, C_pad - C),))
    else:
        w2p, b2p = w2, b2

    mm_dtype = jnp.bfloat16 if use_bf16 else jnp.float32
    w1p = w1p.astype(mm_dtype)
    w2p = w2p.astype(mm_dtype)

    t2d = t.reshape(B, 1).astype(jnp.float32)
    b1_2d = b1.reshape(1, H).astype(jnp.float32)
    b2_2d = b2p.reshape(1, C_pad).astype(jnp.float32)

    # ---------- batch blocking ----------
    # Grid only when it actually pays (per-step overhead ~0.35 us). When we do
    # grid, use an even number of blocks so a v7x megacore can shard the
    # "parallel" axis across its two TensorCores.
    if B > block_b:
        n_blocks = -(-B // block_b)          # cdiv
        n_blocks += n_blocks % 2             # round up to even (v7x: 2 TCs)
        if B % n_blocks == 0 and (B // n_blocks) % 8 == 0:
            bb = B // n_blocks
        else:
            bb = B                           # irregular B: single big block
    else:
        bb = B
    grid = (B // bb,)

    wbytes = jnp.dtype(mm_dtype).itemsize
    cost = pl.CostEstimate(
        flops=2 * B * C * H + 2 * B * H * C_pad,
        transcendentals=B * C + B * H,       # sin + sigmoid
        bytes_accessed=(4 * B + 4 * 2 * C + wbytes * C * H + 4 * H
                        + wbytes * H * C_pad + 4 * C_pad + 4 * B * C_pad),
    )

    out = pl.pallas_call(
        _lcm_time_embedding_kernel,
        out_shape=jax.ShapeDtypeStruct((B, C_pad), jnp.float32),
        grid_spec=pltpu.PrefetchScalarGridSpec(
            num_scalar_prefetch=0,
            grid=grid,
            in_specs=[
                pl.BlockSpec((bb, 1), lambda i: (i, 0)),        # t block
                pl.BlockSpec((2, C), lambda i: (0, 0)),         # freq/phase
                pl.BlockSpec((C, H), lambda i: (0, 0)),         # w1 (invariant)
                pl.BlockSpec((1, H), lambda i: (0, 0)),         # b1 (invariant)
                pl.BlockSpec((H, C_pad), lambda i: (0, 0)),     # w2 (invariant)
                pl.BlockSpec((1, C_pad), lambda i: (0, 0)),     # b2 (invariant)
            ],
            out_specs=pl.BlockSpec((bb, C_pad), lambda i: (i, 0)),
        ),
        compiler_params=pltpu.CompilerParams(
            dimension_semantics=("parallel",)),
        cost_estimate=cost,
    )(t2d, table, w1p, b1_2d, w2p, b2_2d)

    if return_padded or C_pad == C:
        return out
    # Separate XLA copy; prefer return_padded=True when the consumer can
    # accept (or ignore) the padded layout.
    return out[:, :C]


def init_params(key, feat_channels):
    """Deterministic xavier_uniform weights, zero biases (as _reset_parameters)."""
    C = feat_channels
    H = 4 * C
    k1, k2 = jax.random.split(key)

    def xavier(k, fan_in, fan_out):
        bound = math.sqrt(6.0 / (fan_in + fan_out))
        # stored as [in, out] so the kernel computes x @ W
        return jax.random.uniform(k, (fan_in, fan_out), jnp.float32, -bound, bound)

    w1 = xavier(k1, C, H)
    b1 = jnp.zeros((H,), jnp.float32)
    w2 = xavier(k2, H, C)
    b2 = jnp.zeros((C,), jnp.float32)
    return w1, b1, w2, b2


def reference(t, w1, b1, w2, b2):
    """Pure-JAX (f32) reference replicating the PyTorch forward."""
    B = t.shape[0]
    C = w1.shape[0]
    half = C // 2
    denom = float(max(half - 1, 1))
    freq = 1.0 / 10000.0 ** (jnp.arange(half, dtype=jnp.float32) / denom)
    t_freq = t[:, None] * freq[None, :]                 # [B, C//2]
    emb = jnp.zeros((B, C), jnp.float32)
    emb = emb.at[:, 0::2].set(jnp.sin(t_freq))
    emb = emb.at[:, 1::2].set(jnp.cos(t_freq))
    h = emb @ w1 + b1
    h = h * jax.nn.sigmoid(h)
    return h @ w2 + b2


if __name__ == "__main__":
    key = jax.random.PRNGKey(0)
    k_param, k_t, k_t2 = jax.random.split(key, 3)

    feat_channels = 32   # C (MLP hidden is 4*C = 128)
    batch = 8

    w1, b1, w2, b2 = init_params(k_param, feat_channels)
    t = jax.random.uniform(k_t, (batch,), jnp.float32, 0.0, 1000.0)
    ref = reference(t, w1, b1, w2, b2)

    # f32 path: bit-faithful to the PyTorch forward.
    out_f32 = jax.block_until_ready(
        lcm_time_embedding(t, w1, b1, w2, b2, use_bf16=False))
    assert out_f32.shape == (batch, feat_channels)
    assert jnp.allclose(out_f32, ref, atol=1e-4, rtol=1e-4), (
        f"max abs err (f32) = {jnp.max(jnp.abs(out_f32 - ref))}"
    )

    # bf16 fast path (default): halved weight DMA, native MXU rate.
    out_bf16 = jax.block_until_ready(lcm_time_embedding(t, w1, b1, w2, b2))
    assert out_bf16.shape == (batch, feat_channels)
    assert jnp.allclose(out_bf16, ref, atol=5e-2, rtol=5e-2), (
        f"max abs err (bf16) = {jnp.max(jnp.abs(out_bf16 - ref))}"
    )

    # Gridded / pipelined path (2 batch blocks -> v7x-friendly parallel grid).
    t_big = jax.random.uniform(k_t2, (256,), jnp.float32, 0.0, 1000.0)
    ref_big = reference(t_big, w1, b1, w2, b2)
    out_big = jax.block_until_ready(
        lcm_time_embedding(t_big, w1, b1, w2, b2, block_b=128))
    assert out_big.shape == (256, feat_channels)
    assert jnp.allclose(out_big, ref_big, atol=5e-2, rtol=5e-2), (
        f"max abs err (gridded) = {jnp.max(jnp.abs(out_big - ref_big))}"
    )

    print("KERNEL_OK")
</pallas_src>

<mosaic_0001>
module attributes {stable_mosaic.version = 11 : i64} {
  func.func @_lcm_time_embedding_kernel(%arg0: i32, %arg1: memref<8x1xf32, #tpu.memory_space<vmem>>, %arg2: memref<2x32xf32, #tpu.memory_space<vmem>>, %arg3: memref<32x128xf32, #tpu.memory_space<vmem>>, %arg4: memref<1x128xf32, #tpu.memory_space<vmem>>, %arg5: memref<128x128xf32, #tpu.memory_space<vmem>>, %arg6: memref<1x128xf32, #tpu.memory_space<vmem>>, %arg7: memref<8x128xf32, #tpu.memory_space<vmem>>) attributes {dimension_semantics = [#tpu.dimension_semantics<parallel>], iteration_bounds = array<i64: 1>, scalar_prefetch = 0 : i64, scratch_operands = 0 : i64, tpu.core_type = #tpu.core_type<tc>, window_params = [{transform_indices = @transform_0, window_bounds = array<i64: 8, 1>}, {pipeline_mode = #tpu.pipeline_mode<synchronous>, transform_indices = @transform_1, window_bounds = array<i64: 2, 32>}, {pipeline_mode = #tpu.pipeline_mode<synchronous>, transform_indices = @transform_2, window_bounds = array<i64: 32, 128>}, {pipeline_mode = #tpu.pipeline_mode<synchronous>, transform_indices = @transform_3, window_bounds = array<i64: 1, 128>}, {pipeline_mode = #tpu.pipeline_mode<synchronous>, transform_indices = @transform_4, window_bounds = array<i64: 128, 128>}, {pipeline_mode = #tpu.pipeline_mode<synchronous>, transform_indices = @transform_5, window_bounds = array<i64: 1, 128>}, {transform_indices = @transform_6, window_bounds = array<i64: 8, 128>}]} {
    %c0 = arith.constant 0 : index
    %c0_0 = arith.constant 0 : index
    %0 = vector.load %arg1[%c0, %c0_0] : memref<8x1xf32, #tpu.memory_space<vmem>>, vector<8x1xf32>
    %c0_1 = arith.constant 0 : index
    %c0_2 = arith.constant 0 : index
    %1 = vector.load %arg2[%c0_1, %c0_2] : memref<2x32xf32, #tpu.memory_space<vmem>>, vector<1x32xf32>
    %2 = vector.broadcast %0 : vector<8x1xf32> to vector<8x32xf32>
    %3 = vector.broadcast %1 : vector<1x32xf32> to vector<8x32xf32>
    %4 = arith.mulf %2, %3 : vector<8x32xf32>
    %c1 = arith.constant 1 : index
    %c0_3 = arith.constant 0 : index
    %5 = vector.load %arg2[%c1, %c0_3] : memref<2x32xf32, #tpu.memory_space<vmem>>, vector<1x32xf32>
    %6 = vector.broadcast %5 : vector<1x32xf32> to vector<8x32xf32>
    %7 = arith.addf %4, %6 : vector<8x32xf32>
    %8 = math.sin %7 : vector<8x32xf32>
    %c0_4 = arith.constant 0 : index
    %c0_5 = arith.constant 0 : index
    %9 = vector.load %arg3[%c0_4, %c0_5] : memref<32x128xf32, #tpu.memory_space<vmem>>, vector<32x128xf32>
    %cst = arith.constant dense<0.000000e+00> : vector<8x128xf32>
    %10 = tpu.matmul %8, %9, %cst {dimension_numbers = #tpu.dot_dimension_numbers<[1], [0], [0], [1], [0, 0, 1, 1], [], []>} : vector<8x32xf32>, vector<32x128xf32>, vector<8x128xf32> -> vector<8x128xf32>
    %c0_6 = arith.constant 0 : index
    %c0_7 = arith.constant 0 : index
    %11 = vector.load %arg4[%c0_6, %c0_7] : memref<1x128xf32, #tpu.memory_space<vmem>>, vector<1x128xf32>
    %12 = vector.broadcast %11 : vector<1x128xf32> to vector<8x128xf32>
    %13 = arith.addf %10, %12 : vector<8x128xf32>
    %14 = arith.negf %13 : vector<8x128xf32>
    %15 = math.exp %14 : vector<8x128xf32>
    %cst_8 = arith.constant 1.000000e+00 : f32
    %16 = vector.broadcast %cst_8 : f32 to vector<8x128xf32>
    %17 = arith.addf %16, %15 : vector<8x128xf32>
    %18 = arith.divf %16, %17 : vector<8x128xf32>
    %19 = arith.mulf %13, %18 : vector<8x128xf32>
    %c0_9 = arith.constant 0 : index
    %c0_10 = arith.constant 0 : index
    %20 = vector.load %arg5[%c0_9, %c0_10] : memref<128x128xf32, #tpu.memory_space<vmem>>, vector<128x128xf32>
    %cst_11 = arith.constant dense<0.000000e+00> : vector<8x128xf32>
    %21 = tpu.matmul %19, %20, %cst_11 {dimension_numbers = #tpu.dot_dimension_numbers<[1], [0], [0], [1], [0, 0, 1, 1], [], []>} : vector<8x128xf32>, vector<128x128xf32>, vector<8x128xf32> -> vector<8x128xf32>
    %c0_12 = arith.constant 0 : index
    %c0_13 = arith.constant 0 : index
    %22 = vector.load %arg6[%c0_12, %c0_13] : memref<1x128xf32, #tpu.memory_space<vmem>>, vector<1x128xf32>
    %23 = vector.broadcast %22 : vector<1x128xf32> to vector<8x128xf32>
    %24 = arith.addf %21, %23 : vector<8x128xf32>
    %c0_14 = arith.constant 0 : index
    %c0_15 = arith.constant 0 : index
    %25 = vector.load %arg7[%c0_14, %c0_15] : memref<8x128xf32, #tpu.memory_space<vmem>>, vector<8x128xf32>
    tpu.vector_store %arg7[%c0_14, %c0_15], %24 {strides = array<i32>} : memref<8x128xf32, #tpu.memory_space<vmem>>, vector<8x128xf32>,
    return
  }
  func.func @transform_0(%arg0: i32) -> (i32, i32) {
    %c0_i32 = arith.constant 0 : i32
    %c0_i32_0 = arith.constant 0 : i32
    return %arg0, %c0_i32 : i32, i32
  }
  func.func @transform_1(%arg0: i32) -> (i32, i32) {
    %c0_i32 = arith.constant 0 : i32
    %c0_i32_0 = arith.constant 0 : i32
    %c0_i32_1 = arith.constant 0 : i32
    return %c0_i32, %c0_i32_0 : i32, i32
  }
  func.func @transform_2(%arg0: i32) -> (i32, i32) {
    %c0_i32 = arith.constant 0 : i32
    %c0_i32_0 = arith.constant 0 : i32
    %c0_i32_1 = arith.constant 0 : i32
    return %c0_i32, %c0_i32_0 : i32, i32
  }
  func.func @transform_3(%arg0: i32) -> (i32, i32) {
    %c0_i32 = arith.constant 0 : i32
    %c0_i32_0 = arith.constant 0 : i32
    %c0_i32_1 = arith.constant 0 : i32
    return %c0_i32, %c0_i32_0 : i32, i32
  }
  func.func @transform_4(%arg0: i32) -> (i32, i32) {
    %c0_i32 = arith.constant 0 : i32
    %c0_i32_0 = arith.constant 0 : i32
    %c0_i32_1 = arith.constant 0 : i32
    return %c0_i32, %c0_i32_0 : i32, i32
  }
  func.func @transform_5(%arg0: i32) -> (i32, i32) {
    %c0_i32 = arith.constant 0 : i32
    %c0_i32_0 = arith.constant 0 : i32
    %c0_i32_1 = arith.constant 0 : i32
    return %c0_i32, %c0_i32_0 : i32, i32
  }
  func.func @transform_6(%arg0: i32) -> (i32, i32) {
    %c0_i32 = arith.constant 0 : i32
    %c0_i32_0 = arith.constant 0 : i32
    return %arg0, %c0_i32 : i32, i32
  }
}

</mosaic_0001>

<llo_original>
// kernel: tpu_custom_call.1
$region0: #{tpu_custom_call.1}
  #allocation0 [shape = 'u32[]', space=smem, size = 0x4, offset = 0x4, fixed_abs, tag = 'smem constant byte address 0x4 - core index']
  #allocation1 [shape = 'u32[144,128]{1,0:T(1,128)}', space=vmem, size = 0x12000, scoped, tag = 'internal scratch']
  %s0 = inlined_call_operand.vmem [shape: f32[8,1], index: 0, kind: input, shape index: {}]
  %s1 = inlined_call_operand.vmem [shape: f32[2,32], index: 1, kind: input, shape index: {}]
  %s2 = inlined_call_operand.hbm [shape: f32[32,128], index: 2, kind: input, shape index: {}]
  %s3 = inlined_call_operand.vmem [shape: f32[1,128], index: 3, kind: input, shape index: {}]
  %s4 = inlined_call_operand.hbm [shape: f32[128,128], index: 4, kind: input, shape index: {}]
  %s5 = inlined_call_operand.vmem [shape: f32[1,128], index: 5, kind: input, shape index: {}]
  %s6 = inlined_call_operand.hbm [shape: f32[8,128], index: 6, kind: output, shape index: {}]
  %s7 = sld [smem:[#allocation0]]
  $region42: #{tpu_custom_call.1} parent=0
    _
  %s9 = ssub.s32 1, %s7
  %s10 = scalar_select 0, %s9, %s7
  $region1: #{tpu_custom_call.1} parent=0
    #allocation2 [shape = 'u8[16384]{0}', space=vmem, size = 0x4000, scoped, tag = 'input window, operand 2, single buffered']
    #allocation3 [shape = 's32[1]{0}', space=sflag, size = 0x4, scoped, tag = 'scoped memory for tpu_custom_call.1']
    #allocation4 [shape = 's32[1]{0}', space=sflag, size = 0x4, scoped, tag = 'scoped memory for tpu_custom_call.1']
    #allocation5 [shape = 'u8[65536]{0}', space=vmem, size = 0x10000, scoped, tag = 'input window, operand 4, single buffered']
    #allocation6 [shape = 's32[1]{0}', space=sflag, size = 0x4, scoped, tag = 'scoped memory for tpu_custom_call.1']
    #allocation7 [shape = 'u8[4096]{0}', space=vmem, size = 0x1000, scoped, tag = 'output window, operand 0, single buffered']
    %11 = vsyncpa [#allocation3], 0
    %12 = vsyncpa [#allocation6], 0
    %13 = vsyncpa [#allocation4], 0
    // Predicated region
    $region2: #{tpu_custom_call.1} parent=1 // pred_check
      _
    $region3: #{tpu_custom_call.1} parent=1 // pred_check_branch
      %15 = sbr.rel (0) target = $region5
    $region4: #{tpu_custom_call.1} parent=1 // pred_region
      _
    $region5: #{tpu_custom_call.1} parent=1 // pred_fallthru
      _
    // Predicated region
    $region6: #{tpu_custom_call.1} parent=1 // pred_check
      _
    $region7: #{tpu_custom_call.1} parent=1 // pred_check_branch
      %17 = sbr.rel (0) target = $region9
    $region8: #{tpu_custom_call.1} parent=1 // pred_region
      _
    $region9: #{tpu_custom_call.1} parent=1 // pred_fallthru
      _
    // Predicated region
    $region10: #{tpu_custom_call.1} parent=1 // pred_check
      _
    $region11: #{tpu_custom_call.1} parent=1 // pred_check_branch
      %19 = sbr.rel (0) target = $region13
    $region12: #{tpu_custom_call.1} parent=1 // pred_region
      %s21 = ssub.s32 512, 512
      %22 = vsyncadd [#allocation3], %s21
      %s23 = sshll.u32 [#allocation2], 4
      %s24 = int_to_ptr.vmem [resolvable:$true] %s23
      %29 = dma.hbm_to_vmem [thread:$0]  %s2, 512, %s24, [#allocation3], 128, 128, 8
    $region13: #{tpu_custom_call.1} parent=1 // pred_fallthru
      _
    // Predicated region
    $region14: #{tpu_custom_call.1} parent=1 // pred_check
      _
    $region15: #{tpu_custom_call.1} parent=1 // pred_check_branch
      %31 = sbr.rel (0) target = $region17
    $region16: #{tpu_custom_call.1} parent=1 // pred_region
      _
    $region17: #{tpu_custom_call.1} parent=1 // pred_fallthru
      _
    // Predicated region
    $region18: #{tpu_custom_call.1} parent=1 // pred_check
      _
    $region19: #{tpu_custom_call.1} parent=1 // pred_check_branch
      %33 = sbr.rel (0) target = $region21
    $region20: #{tpu_custom_call.1} parent=1 // pred_region
      %s35 = ssub.s32 2048, 2048
      %36 = vsyncadd [#allocation6], %s35
      %s37 = sshll.u32 [#allocation5], 4
      %s38 = int_to_ptr.vmem [resolvable:$true] %s37
      %43 = dma.hbm_to_vmem [thread:$0]  %s4, 2048, %s38, [#allocation6], 128, 128, 8
    $region21: #{tpu_custom_call.1} parent=1 // pred_fallthru
      _
    // Predicated region
    $region22: #{tpu_custom_call.1} parent=1 // pred_check
      _
    $region23: #{tpu_custom_call.1} parent=1 // pred_check_branch
      %45 = sbr.rel (0) target = $region25
    $region24: #{tpu_custom_call.1} parent=1 // pred_region
      _
    $region25: #{tpu_custom_call.1} parent=1 // pred_fallthru
      _
    // Predicated region
    $region26: #{tpu_custom_call.1} parent=1 // pred_check
      _
    $region27: #{tpu_custom_call.1} parent=1 // pred_check_branch
      %47 = sbr.rel (0) target = $region29
    $region28: #{tpu_custom_call.1} parent=1 // pred_region
      %48 = dma.done [#allocation3], 512
    $region29: #{tpu_custom_call.1} parent=1 // pred_fallthru
      _
    // Predicated region
    $region30: #{tpu_custom_call.1} parent=1 // pred_check
      _
    $region31: #{tpu_custom_call.1} parent=1 // pred_check_branch
      %50 = sbr.rel (0) target = $region33
    $region32: #{tpu_custom_call.1} parent=1 // pred_region
      %51 = dma.done [#allocation6], 2048
    $region33: #{tpu_custom_call.1} parent=1 // pred_fallthru
      _
    %v52 = vld [vmem:[%s0] sm:$0xff]
    %v53 = vld [vmem:[%s1] sm:$0x1]
    %55 = vset.pattern.permute.xlu0 0
    %56 = vperm.xlu0 %55, %v52
    %v57 = vpop.permute.xlu0 %56
    %v59 = vlaneseq
    %v60 = vshrl.u32 %v59, 7
    %v61 = vsub.s32 0, %v60
    %v62 = vrot.slane %v53, %v61
    %v63 = vmul.f32 %v57, %v62
    %v64 = vld [vmem:[%s1 + $0x1] sm:$0x1]
    %v65 = vlaneseq
    %v66 = vshrl.u32 %v65, 7
    %v67 = vsub.s32 0, %v66
    %v68 = vrot.slane %v64, %v67
    %v69 = vadd.f32 %v63, %v68
    %v70 = vand.u32 2147483647, %v69
    %vm71 = vcmp.le.f32.partialorder %v70, 0.7853982
    %vm72 = vcmp.lt.s32.totalorder %v69, 0
    %v73 = vand.u32 %v69, 2139095040
    %v74 = vshrl.u32 %v73, 23
    %v75 = vsub.s32 %v74, 127
    %v76 = vand.u32 2147483647, %v69
    %v77 = vand.u32 %v76, 8388607
    %v78 = vor.u32 %v77, 8388608
    %v79 = vsub.s32 0, %v78
    %v80 = vadd.s32 %v75, 1
    %vm81 = vcmp.gt.s32.totalorder %v80, 0
    %v82 = vsel %vm81, %v80, 0
    %v83 = vshrl.u32 %v82, 5
    %v84 = vand.u32 %v82, 31
    %v85 = vsub.s32 32, %v84
    %v86 = vshrl.u32 683565275, %v85
    %v87 = vshll.u32 683565275, %v84
    %v88 = vshrl.u32 2475754826, %v85
    %v89 = vor.u32 %v87, %v88
    %v90 = vshll.u32 2475754826, %v84
    %v91 = vshrl.u32 2131351028, %v85
    %v92 = vor.u32 %v90, %v91
    %v93 = vshll.u32 2131351028, %v84
    %v94 = vshrl.u32 2102212464, %v85
    %v95 = vor.u32 %v93, %v94
    %v96 = vshll.u32 2102212464, %v84
    %v97 = vshrl.u32 920167782, %v85
    %v98 = vor.u32 %v96, %v97
    %v99 = vshll.u32 920167782, %v84
    %v100 = vshrl.u32 1326507024, %v85
    %v101 = vor.u32 %v99, %v100
    %vm102 = vcmp.lt.s32.totalorder %v83, 1
    %vm103 = vcmp.lt.s32.totalorder %v83, 2
    %vm104 = vcmp.lt.s32.totalorder %v83, 3
    %vm105 = vcmp.lt.s32.totalorder %v83, 4
    %v106 = vsel %vm102, %v86, %v89
    %v107 = vsel %vm105, %v95, 2102212464
    %v108 = vsel %vm104, %v92, %v107
    %v109 = vsel %vm103, %v106, %v108
    %v110 = vsel %vm102, %v89, %v92
    %v111 = vsel %vm105, %v98, 920167782
    %v112 = vsel %vm104, %v95, %v111
    %v113 = vsel %vm103, %v110, %v112
    %v114 = vsel %vm102, %v92, %v95
    %v115 = vsel %vm105, %v101, 1326507024
    %v116 = vsel %vm104, %v98, %v115
    %v117 = vsel %vm103, %v114, %v116
    %v118 = vshll.u32 %v78, 8
    %v119 = vmul.u32.u64.compose %v118, %v117
    %v120 = vextract.low.u32 %v119
    %v121 = vextract.high.u32 %v119
    %v122 = vmul.u32.u64.compose %v118, %v113
    %v123 = vextract.low.u32 %v122
    %v124 = vextract.high.u32 %v122
    %v125 = vmul.u32 %v118, %v109
    %v126 = vadd.s32 %v121, %v123
    %vm127 = vc.u32 %v121, %v123
    %v128 = vadd.s32 %v124, 1
    %v129 = vsel %vm127, %v128, %v124
    %v130 = vadd.s32 %v125, %v129
    %v131 = vadd.s32 %v130, 536870912
    %v132 = vshrl.u32 %v131, 30
    %v133 = vshll.u32 %v132, 30
    %v134 = vsub.s32 %v130, %v133
    %vm135 = vcmp.lt.s32.totalorder %v134, 0
    %v136 = vsub.s32 0, %v134
    %v137 = vsel %vm135, %v136, %v134
    %v138 = vclz %v137
    %v139 = vsub.s32 %v138, 2
    %vm140 = vcmp.gt.s32.totalorder 0, %v139
    %v141 = vsel %vm140, 0, %v139
    %v142 = vsub.s32 32, %v141
    %v143 = vshll.u32 %v134, %v141
    %v144 = vshrl.u32 %v126, %v142
    %v145 = vor.u32 %v143, %v144
    %v146 = vsub.s32 4294967266, %v141
    %v147 = vadd.s32 %v146, 127
    %v148 = vshll.u32 %v147, 23
    %v149 = vor.u32 4788187, %v148
    %v150 = vand.u32 2147483647, %v149
    %v152 = vcvt.s32.f32 %v145
    %v153 = vmul.f32 %v152, %v150
    %v154 = vxor.u32 %v153, 2147483648
    %v155 = vsel %vm72, %v154, %v153
    %v156 = vsub.s32 4, %v132
    %v157 = vsel %vm72, %v156, %v132
    %v158 = vsel %vm71, %v69, %v155
    %v159 = vsel %vm71, 0, %v157
    %v160 = vcosq.f32.pop %v158
    %v161 = vsinq.f32.pop %v158
    %vm162 = vweird.f32 %v69
    %v163 = vadd.s32 %v159, 3
    %v164 = vand.u32 %v163, 3
    %vm165 = vcmp.lt.s32.totalorder %v164, 2
    %vm166 = vcmp.eq.s32.totalorder %v164, 0
    %v167 = vxor.u32 %v161, 2147483648
    %v168 = vsel %vm166, %v160, %v167
    %vm169 = vcmp.eq.s32.totalorder %v164, 2
    %v170 = vxor.u32 %v160, 2147483648
    %v171 = vsel %vm169, %v170, %v161
    %v172 = vsel %vm165, %v168, %v171
    %v173 = vsel %vm162, nan, %v172
    %v174 = vld [vmem:[#allocation2] sm:$0xff]
    %v175 = vld [vmem:[#allocation2 + $0x8] sm:$0xff]
    %v176 = vld [vmem:[#allocation2 + $0x10] sm:$0xff]
    %v177 = vld [vmem:[#allocation2 + $0x18] sm:$0xff]
    %v178 = vld [vmem:[%s3] sm:$0x1]
    %v180 = vlaneseq
    %v181 = vshrl.u32 %v180, 7
    %v182 = vsub.s32 0, %v181
    %v183 = vrot.slane %v178, %v182
    %vm185 = vcmask 261120
    %v187 = vsel %vm185, %v173, 0
    %189 = vmatprep.subr.mxu0 0.0
    %190 = vmatpush1.msra.mxu0 %v174
    %191 = vmatprep.subr.mxu0 0.0
    %192 = vmatpush1.msra.mxu0 %v175
    %193 = vmatprep.subr.mxu0 0.0
    %194 = vmatpush1.msra.mxu0 %v176
    %195 = vmatprep.subr.mxu0 0.0
    %196 = vmatpush1.msra.mxu0 %v177
    %197 = vmatprep.subr.mxu0 0.0
    %198 = vmatpush1.msra.mxu0 0.0
    %199 = vmatprep.subr.mxu0 0.0
    %200 = vmatpush1.msra.mxu0 0.0
    %201 = vmatprep.subr.mxu0 0.0
    %202 = vmatpush1.msra.mxu0 0.0
    %203 = vmatprep.subr.mxu0 0.0
    %204 = vmatpush1.msra.mxu0 0.0
    %205 = vmatprep.subr.mxu0 0.0
    %206 = vmatpush1.msra.mxu0 0.0
    %207 = vmatprep.subr.mxu0 0.0
    %208 = vmatpush1.msra.mxu0 0.0
    %209 = vmatprep.subr.mxu0 0.0
    %210 = vmatpush1.msra.mxu0 0.0
    %211 = vmatprep.subr.mxu0 0.0
    %212 = vmatpush1.msra.mxu0 0.0
    %213 = vmatprep.subr.mxu0 0.0
    %214 = vmatpush1.msra.mxu0 0.0
    %215 = vmatprep.subr.mxu0 0.0
    %216 = vmatpush1.msra.mxu0 0.0
    %217 = vmatprep.subr.mxu0 0.0
    %218 = vmatpush1.msra.mxu0 0.0
    %219 = vmatprep.subr.mxu0 0.0
    %220 = vmatpush1.msra.mxu0 0.0
    %221 = vmatprep.subr.mxu0 0.0
    %222 = vmatpush1.msra.mxu0 0.0
    %223 = vmatprep.subr.mxu0 0.0
    %224 = vmatpush1.msra.mxu0 0.0
    %225 = vmatprep.subr.mxu0 0.0
    %226 = vmatpush1.msra.mxu0 0.0
    %227 = vmatprep.subr.mxu0 0.0
    %228 = vmatpush1.msra.mxu0 0.0
    %229 = vmatprep.subr.mxu0 0.0
    %230 = vmatpush1.msra.mxu0 0.0
    %231 = vmatprep.subr.mxu0 0.0
    %232 = vmatpush1.msra.mxu0 0.0
    %233 = vmatprep.subr.mxu0 0.0
    %234 = vmatpush1.msra.mxu0 0.0
    %235 = vmatprep.subr.mxu0 0.0
    %236 = vmatpush1.msra.mxu0 0.0
    %237 = vmatprep.subr.mxu0 0.0
    %238 = vmatpush1.msra.mxu0 0.0
    %239 = vmatprep.subr.mxu0 0.0
    %240 = vmatpush1.msra.mxu0 0.0
    %241 = vmatprep.subr.mxu0 0.0
    %242 = vmatpush1.msra.mxu0 0.0
    %243 = vmatprep.subr.mxu0 0.0
    %244 = vmatpush1.msra.mxu0 0.0
    %245 = vmatprep.subr.mxu0 0.0
    %246 = vmatpush1.msra.mxu0 0.0
    %247 = vmatprep.subr.mxu0 0.0
    %248 = vmatpush1.msra.mxu0 0.0
    %249 = vmatprep.subr.mxu0 0.0
    %250 = vmatpush1.msra.mxu0 0.0
    %251 = vmatprep.subr.mxu0 0.0
    %252 = vmatpush1.msra.mxu0 0.0
    %253 = vmatprep.mubr.f32.mxu0 0.0
    %254 = vmatmul.mubr.f32.gmra.mrb[0].mxu0 %v187
    %v255 = vpop.f32.mrb[0].mxu0
    %v256 = vadd.f32 %v183, %v255
    %v257 = vpop.f32.mrb[0].mxu0
    %258 = vdwg.mxu0
    %v259 = vxor.u32 %v256, 2147483648
    %v260 = vmul.f32 %v259, 1.442695
    %v261 = vpow.pop %v260
    %v262 = vadd.f32 %v261, 1.0
    %v263 = vrcp.pop %v262
    %v264 = vmul.f32 1.0, %v263
    %v265 = vmul.f32 %v256, %v264
    %v266 = vld [vmem:[#allocation5] sm:$0xff]
    %v267 = vld [vmem:[#allocation5 + $0x8] sm:$0xff]
    %v268 = vld [vmem:[#allocation5 + $0x10] sm:$0xff]
    %v269 = vld [vmem:[#allocation5 + $0x18] sm:$0xff]
    %v270 = vld [vmem:[#allocation5 + $0x20] sm:$0xff]
    %v271 = vld [vmem:[#allocation5 + $0x28] sm:$0xff]
    %v272 = vld [vmem:[#allocation5 + $0x30] sm:$0xff]
    %v273 = vld [vmem:[#allocation5 + $0x38] sm:$0xff]
    %v274 = vld [vmem:[#allocation5 + $0x40] sm:$0xff]
    %v275 = vld [vmem:[#allocation5 + $0x48] sm:$0xff]
    %v276 = vld [vmem:[#allocation5 + $0x50] sm:$0xff]
    %v277 = vld [vmem:[#allocation5 + $0x58] sm:$0xff]
    %v278 = vld [vmem:[#allocation5 + $0x60] sm:$0xff]
    %v279 = vld [vmem:[#allocation5 + $0x68] sm:$0xff]
    %v280 = vld [vmem:[#allocation5 + $0x70] sm:$0xff]
    %v281 = vld [vmem:[#allocation5 + $0x78] sm:$0xff]
    %v282 = vld [vmem:[%s5] sm:$0x1]
    %v284 = vlaneseq
    %v285 = vshrl.u32 %v284, 7
    %v286 = vsub.s32 0, %v285
    %v287 = vrot.slane %v282, %v286
    %289 = vmatprep.subr.mxu0 0.0
    %290 = vmatpush1.msra.mxu0 %v266
    %291 = vmatprep.subr.mxu0 0.0
    %292 = vmatpush1.msra.mxu0 %v267
    %293 = vmatprep.subr.mxu0 0.0
    %294 = vmatpush1.msra.mxu0 %v268
    %295 = vmatprep.subr.mxu0 0.0
    %296 = vmatpush1.msra.mxu0 %v269
    %297 = vmatprep.subr.mxu0 0.0
    %298 = vmatpush1.msra.mxu0 %v270
    %299 = vmatprep.subr.mxu0 0.0
    %300 = vmatpush1.msra.mxu0 %v271
    %301 = vmatprep.subr.mxu0 0.0
    %302 = vmatpush1.msra.mxu0 %v272
    %303 = vmatprep.subr.mxu0 0.0
    %304 = vmatpush1.msra.mxu0 %v273
    %305 = vmatprep.subr.mxu0 0.0
    %306 = vmatpush1.msra.mxu0 %v274
    %307 = vmatprep.subr.mxu0 0.0
    %308 = vmatpush1.msra.mxu0 %v275
    %309 = vmatprep.subr.mxu0 0.0
    %310 = vmatpush1.msra.mxu0 %v276
    %311 = vmatprep.subr.mxu0 0.0
    %312 = vmatpush1.msra.mxu0 %v277
    %313 = vmatprep.subr.mxu0 0.0
    %314 = vmatpush1.msra.mxu0 %v278
    %315 = vmatprep.subr.mxu0 0.0
    %316 = vmatpush1.msra.mxu0 %v279
    %317 = vmatprep.subr.mxu0 0.0
    %318 = vmatpush1.msra.mxu0 %v280
    %319 = vmatprep.subr.mxu0 0.0
    %320 = vmatpush1.msra.mxu0 %v281
    %321 = vmatprep.subr.mxu0 0.0
    %322 = vmatpush1.msra.mxu0 0.0
    %323 = vmatprep.subr.mxu0 0.0
    %324 = vmatpush1.msra.mxu0 0.0
    %325 = vmatprep.subr.mxu0 0.0
    %326 = vmatpush1.msra.mxu0 0.0
    %327 = vmatprep.subr.mxu0 0.0
    %328 = vmatpush1.msra.mxu0 0.0
    %329 = vmatprep.subr.mxu0 0.0
    %330 = vmatpush1.msra.mxu0 0.0
    %331 = vmatprep.subr.mxu0 0.0
    %332 = vmatpush1.msra.mxu0 0.0
    %333 = vmatprep.subr.mxu0 0.0
    %334 = vmatpush1.msra.mxu0 0.0
    %335 = vmatprep.subr.mxu0 0.0
    %336 = vmatpush1.msra.mxu0 0.0
    %337 = vmatprep.subr.mxu0 0.0
    %338 = vmatpush1.msra.mxu0 0.0
    %339 = vmatprep.subr.mxu0 0.0
    %340 = vmatpush1.msra.mxu0 0.0
    %341 = vmatprep.subr.mxu0 0.0
    %342 = vmatpush1.msra.mxu0 0.0
    %343 = vmatprep.subr.mxu0 0.0
    %344 = vmatpush1.msra.mxu0 0.0
    %345 = vmatprep.subr.mxu0 0.0
    %346 = vmatpush1.msra.mxu0 0.0
    %347 = vmatprep.subr.mxu0 0.0
    %348 = vmatpush1.msra.mxu0 0.0
    %349 = vmatprep.subr.mxu0 0.0
    %350 = vmatpush1.msra.mxu0 0.0
    %351 = vmatprep.subr.mxu0 0.0
    %352 = vmatpush1.msra.mxu0 0.0
    %353 = vmatprep.mubr.f32.mxu0 0.0
    %354 = vmatmul.mubr.f32.gmra.mrb[0].mxu0 %v265
    %v355 = vpop.f32.mrb[0].mxu0
    %v356 = vadd.f32 %v287, %v355
    %v357 = vpop.f32.mrb[0].mxu0
    %358 = vdwg.mxu0
    %359 = vst [vmem:[#allocation7] sm:$0xff] %v356
    // Predicated region
    $region34: #{tpu_custom_call.1} parent=1 // pred_check
      _
    $region35: #{tpu_custom_call.1} parent=1 // pred_check_branch
      %361 = sbr.rel (0) target = $region37
    $region36: #{tpu_custom_call.1} parent=1 // pred_region
      %s363 = ssub.s32 128, 128
      %364 = vsyncadd [#allocation4], %s363
      %s366 = sshll.u32 [#allocation7], 4
      %s367 = int_to_ptr.vmem [resolvable:$true] %s366
      %369 = dma.vmem_to_hbm [thread:$0]  %s367, 128, %s6, [#allocation4]
    $region37: #{tpu_custom_call.1} parent=1 // pred_fallthru
      _
    // Predicated region
    $region38: #{tpu_custom_call.1} parent=1 // pred_check
      _
    $region39: #{tpu_custom_call.1} parent=1 // pred_check_branch
      %371 = sbr.rel (0) target = $region41
    $region40: #{tpu_custom_call.1} parent=1 // pred_region
      %372 = dma.done [#allocation4], 128
    $region41: #{tpu_custom_call.1} parent=1 // pred_fallthru
      _
    %373 = vsyncpa [#allocation3], 1
    %374 = vsyncpa [#allocation6], 1
    %375 = vsyncpa [#allocation4], 1

</llo_original>
